<compile_context>
chip_gen: v6e
topology: v6e:2x2x1
jax: 0.10.0
libtpu: 0.0.40
codegen_flags: <defaults>
</compile_context>

<pallas_src>
import functools
import math

import jax
import jax.numpy as jnp
from jax.experimental import pallas as pl
from jax.experimental.pallas import tpu as pltpu

BN_EPS = 1e-5        # nn.BatchNorm2d default
LANE = 128
SUB = 8

# bf16 MXU operands; accumulation is f32 via preferred_element_type.  Set to
# jnp.float32 to recover full precision (test tolerances assume bfloat16).
MXU_DTYPE = jnp.bfloat16


def _round_up(n, m):
    return (n + m - 1) // m * m


# ----------------------------------------------------------------------------
# Conv block, pass 1: row-tiled GEMM, emitting per-tile BN partial statistics
# (sum / sum-of-squares) so the row grid axis stays "parallel".
# ----------------------------------------------------------------------------
def _conv_gemm_stats_kernel(patch_ref, w_ref, y_ref, stats_ref):
    y = jnp.dot(patch_ref[...].astype(MXU_DTYPE), w_ref[...].astype(MXU_DTYPE),
                preferred_element_type=jnp.float32)
    y_ref[...] = y.astype(y_ref.dtype)
    # No conv bias (training-mode BN cancels it) -> zero-padded rows contribute exact
    # zeros, so no row masking is needed.  Stats come from the f32 accumulator.
    s1 = jnp.sum(y, axis=0, keepdims=True)             # (1, Cp) sum
    s2 = jnp.sum(y * y, axis=0, keepdims=True)         # (1, Cp) sum of squares
    stats_ref[...] = jnp.concatenate([s1, s2], axis=0)


# ----------------------------------------------------------------------------
# Conv block, pass 2: BatchNorm (training-mode batch stats) + ReLU, row-tiled.
# Single-pass moments: var = E[y^2] - mean^2 (fine at these activation scales).
# ----------------------------------------------------------------------------
def _bn_relu_kernel(n_valid, y_ref, stats_ref, gamma_ref, beta_ref, o_ref):
    inv_n = 1.0 / float(n_valid)
    st = stats_ref[...]
    mean = st[0:1, :] * inv_n
    var = st[1:2, :] * inv_n - mean * mean
    scale = gamma_ref[...] * jax.lax.rsqrt(var + BN_EPS)
    shift = beta_ref[...] - mean * scale
    y = y_ref[...].astype(jnp.float32)
    o_ref[...] = jnp.maximum(y * scale + shift, 0.0).astype(o_ref.dtype)


def conv_bn_relu(x_nchw, w_oihw, bias, gamma, beta, stride, *, row_tile=512):
    del bias  # training-mode BatchNorm exactly cancels a per-channel pre-BN constant
    B, Cin, H, W = x_nchw.shape
    Cout, _, k, _ = w_oihw.shape
    pad = k // 2
    Ho = (H + 2 * pad - k) // stride + 1
    Wo = (W + 2 * pad - k) // stride + 1
    N = B * Ho * Wo
    K = Cin * k * k
    Cp = _round_up(Cout, LANE)
    TN = min(row_tile, _round_up(N, SUB))
    Np = _round_up(N, TN)
    n_tiles = Np // TN

    # ---- im2col in NHWC, materialized at MXU_DTYPE (bf16) to halve its HBM cost ----
    x_nhwc = jnp.transpose(x_nchw, (0, 2, 3, 1))
    xp = jnp.pad(x_nhwc, ((0, 0), (pad, pad), (pad, pad), (0, 0)))
    taps = []
    for kh in range(k):
        for kw in range(k):
            taps.append(xp[:, kh:kh + (Ho - 1) * stride + 1:stride,
                            kw:kw + (Wo - 1) * stride + 1:stride, :])
    patches = jnp.stack(taps, axis=-1)                  # (B, Ho, Wo, Cin, k*k)
    patches = patches.reshape(N, K).astype(MXU_DTYPE)   # ordering (cin, kh, kw)
    if Np != N:
        patches = jnp.pad(patches, ((0, Np - N), (0, 0)))

    # weights (Cout, Cin, kh, kw) -> (K, Cp), zero-padded output channels, bf16
    w_mat = jnp.transpose(w_oihw, (1, 2, 3, 0)).reshape(K, Cout)
    w_mat = jnp.pad(w_mat, ((0, 0), (0, Cp - Cout))).astype(MXU_DTYPE)
    g_row = jnp.pad(gamma.reshape(1, Cout), ((0, 0), (0, Cp - Cout)), constant_values=1.0)
    be_row = jnp.pad(beta.reshape(1, Cout), ((0, 0), (0, Cp - Cout)))

    grid = (n_tiles,)

    # pass 1: GEMM + per-tile BN partial statistics (row axis fully parallel)
    y, part_stats = pl.pallas_call(
        _conv_gemm_stats_kernel,
        out_shape=(jax.ShapeDtypeStruct((Np, Cp), MXU_DTYPE),
                   jax.ShapeDtypeStruct((n_tiles, 2, Cp), jnp.float32)),
        grid=grid,
        in_specs=[pl.BlockSpec((TN, K), lambda i: (i, 0)),
                  pl.BlockSpec((K, Cp), lambda i: (0, 0))],
        out_specs=[pl.BlockSpec((TN, Cp), lambda i: (i, 0)),
                   pl.BlockSpec((pl.Squeezed(), 2, Cp), lambda i: (i, 0, 0))],
        compiler_params=pltpu.CompilerParams(dimension_semantics=("parallel",)),
    )(patches, w_mat)

    stats = jnp.sum(part_stats, axis=0)                 # tiny (2, Cp) reduction in JAX

    # pass 2: BN apply + ReLU
    out = pl.pallas_call(
        functools.partial(_bn_relu_kernel, N),
        out_shape=jax.ShapeDtypeStruct((Np, Cp), x_nchw.dtype),
        grid=grid,
        in_specs=[pl.BlockSpec((TN, Cp), lambda i: (i, 0)),
                  pl.BlockSpec((2, Cp), lambda i: (0, 0)),
                  pl.BlockSpec((1, Cp), lambda i: (0, 0)),
                  pl.BlockSpec((1, Cp), lambda i: (0, 0))],
        out_specs=pl.BlockSpec((TN, Cp), lambda i: (i, 0)),
        compiler_params=pltpu.CompilerParams(dimension_semantics=("parallel",)),
    )(y, stats, g_row, be_row)

    out = out[:N, :Cout].reshape(B, Ho, Wo, Cout)
    return jnp.transpose(out, (0, 3, 1, 2))             # back to NCHW


# ----------------------------------------------------------------------------
# Fused attention block: per (batch, query-tile) grid step.  K / V for the whole
# sequence are computed once per batch element (qi == 0) into VMEM scratch; each
# step computes its Q tile, scores, softmax with deferred normalization, attn @ V,
# the 1x1 projection and ReLU.  1/sqrt(P) is folded into Wq / bq.
# ----------------------------------------------------------------------------
def _attn_fused_kernel(TQ, x_ref, wq_ref, bq_ref, wkv_ref, bkv_ref, wp_ref, bp_ref,
                       o_ref, k_sc, v_sc):
    qi = pl.program_id(1)
    Cp = k_sc.shape[-1]

    @pl.when(qi == 0)
    def _():
        kv = jnp.dot(x_ref[...].astype(MXU_DTYPE), wkv_ref[...],
                     preferred_element_type=jnp.float32) + bkv_ref[...]
        k_sc[...] = kv[:, :Cp].astype(k_sc.dtype)
        v_sc[...] = kv[:, Cp:].astype(v_sc.dtype)

    start = pl.multiple_of(qi * TQ, TQ)
    xq = x_ref[pl.ds(start, TQ), :]                      # (TQ, Cin)
    q = jnp.dot(xq.astype(MXU_DTYPE), wq_ref[...],       # scale pre-folded into wq/bq
                preferred_element_type=jnp.float32) + bq_ref[...]
    s = jax.lax.dot_general(q.astype(MXU_DTYPE), k_sc[...],
                            (((1,), (1,)), ((), ())),
                            preferred_element_type=jnp.float32)     # (TQ, P)
    m = jnp.max(s, axis=-1, keepdims=True)
    e = jnp.exp(s - m)
    l = jnp.sum(e, axis=-1, keepdims=True)
    o = jnp.dot(e.astype(MXU_DTYPE), v_sc[...], preferred_element_type=jnp.float32)
    o = o * pl.reciprocal(l, approx=True)                # deferred softmax norm (EUP)
    o = jnp.dot(o.astype(MXU_DTYPE), wp_ref[...],
                preferred_element_type=jnp.float32) + bp_ref[...]
    o_ref[...] = jnp.maximum(o, 0.0).astype(o_ref.dtype)


def attention_relu(x_nchw, w_qkv, b_qkv, w_proj, b_proj, *, q_tile=256):
    B, Cin, H, W = x_nchw.shape
    C = w_proj.shape[0]
    P = H * W
    Cp = _round_up(C, LANE)
    scale = 1.0 / math.sqrt(P)   # PyTorch divides by k.shape[-1]**0.5 == sqrt(H*W)

    x_seq = jnp.transpose(x_nchw.reshape(B, Cin, P), (0, 2, 1))      # (B, P, Cin)

    def _pad_wT(w2d, s=1.0):                             # (C, Cin) -> (Cin, Cp) bf16
        return jnp.pad(w2d.T * s, ((0, 0), (0, Cp - C))).astype(MXU_DTYPE)

    def _pad_b(b1d, s=1.0):                              # (C,) -> (1, Cp) f32
        return jnp.pad((b1d * s).reshape(1, C), ((0, 0), (0, Cp - C)))

    wq, wk, wv = w_qkv[:C, :, 0, 0], w_qkv[C:2 * C, :, 0, 0], w_qkv[2 * C:, :, 0, 0]
    wq_s = _pad_wT(wq, scale)                                        # (Cin, Cp)
    bq_s = _pad_b(b_qkv[:C], scale)                                  # (1, Cp)
    wkv = jnp.concatenate([_pad_wT(wk), _pad_wT(wv)], axis=1)        # (Cin, 2*Cp)
    bkv = jnp.concatenate([_pad_b(b_qkv[C:2 * C]), _pad_b(b_qkv[2 * C:])], axis=1)
    wp = jnp.pad(w_proj[:, :, 0, 0].T, ((0, Cp - C), (0, Cp - C))).astype(MXU_DTYPE)
    bp = jnp.pad(b_proj.reshape(1, C), ((0, 0), (0, Cp - C)))

    TQ = P
    for cand in (512, 256, 128, 64, 32, 16, 8):
        if cand <= q_tile and P % cand == 0:
            TQ = cand
            break
    nq = P // TQ

    out_seq = pl.pallas_call(
        functools.partial(_attn_fused_kernel, TQ),
        out_shape=jax.ShapeDtypeStruct((B, P, Cp), x_nchw.dtype),
        grid=(B, nq),
        in_specs=[
            pl.BlockSpec((pl.Squeezed(), P, Cin), lambda b, qi: (b, 0, 0)),  # x (full seq)
            pl.BlockSpec((Cin, Cp), lambda b, qi: (0, 0)),                   # wq (scaled)
            pl.BlockSpec((1, Cp), lambda b, qi: (0, 0)),                     # bq (scaled)
            pl.BlockSpec((Cin, 2 * Cp), lambda b, qi: (0, 0)),               # wk|wv
            pl.BlockSpec((1, 2 * Cp), lambda b, qi: (0, 0)),                 # bk|bv
            pl.BlockSpec((Cp, Cp), lambda b, qi: (0, 0)),                    # proj weight
            pl.BlockSpec((1, Cp), lambda b, qi: (0, 0)),                     # proj bias
        ],
        out_specs=pl.BlockSpec((pl.Squeezed(), TQ, Cp), lambda b, qi: (b, qi, 0)),
        scratch_shapes=[pltpu.VMEM((P, Cp), MXU_DTYPE),   # K resident per batch element
                        pltpu.VMEM((P, Cp), MXU_DTYPE)],  # V resident per batch element
        compiler_params=pltpu.CompilerParams(
            dimension_semantics=("parallel", "arbitrary")),
    )(x_seq, wq_s, bq_s, wkv, bkv, wp, bp)

    out = out_seq[:, :, :C]
    return jnp.transpose(out, (0, 2, 1)).reshape(B, C, H, W)         # back to NCHW


# ----------------------------------------------------------------------------
# Head: AdaptiveAvgPool2d((1,1)) + Linear in one kernel.
# ----------------------------------------------------------------------------
def _pool_fc_kernel(x_ref, w_ref, b_ref, o_ref):
    pooled = jnp.mean(x_ref[...], axis=-1)               # (B, C): global average pool
    y = jnp.dot(pooled.astype(MXU_DTYPE), w_ref[...],
                preferred_element_type=jnp.float32) + b_ref[...]
    o_ref[...] = y.astype(o_ref.dtype)


def pool_fc(x_nchw, w_fc, b_fc):
    B, C, H, W = x_nchw.shape
    nc = w_fc.shape[0]
    NCp = _round_up(nc, LANE)
    x_bcp = x_nchw.reshape(B, C, H * W)
    w = jnp.pad(w_fc.T, ((0, 0), (0, NCp - nc))).astype(MXU_DTYPE)   # (C, NCp)
    b = jnp.pad(b_fc.reshape(1, nc), ((0, 0), (0, NCp - nc)))
    vmem = pl.BlockSpec(memory_space=pltpu.MemorySpace.VMEM)
    out = pl.pallas_call(
        _pool_fc_kernel,
        out_shape=jax.ShapeDtypeStruct((B, NCp), jnp.float32),
        in_specs=[vmem, vmem, vmem],
        out_specs=vmem,
    )(x_bcp, w, b)
    return out[:, :nc]


# ----------------------------------------------------------------------------
# Full CoAtNet forward (stage1-3 + pool + fc), composed from the Pallas blocks.
# ----------------------------------------------------------------------------
def coatnet_forward(x, params):
    x = conv_bn_relu(x, *params["s1b1"], stride=1)
    x = conv_bn_relu(x, *params["s1b2"], stride=2)
    x = conv_bn_relu(x, *params["s2b1"], stride=2)
    x = attention_relu(x, *params["s2b2"])
    x = attention_relu(x, *params["s3b1"])
    x = attention_relu(x, *params["s3b2"])
    return pool_fc(x, params["fc"][0], params["fc"][1])


# ----------------------------------------------------------------------------
# Pure-JAX references (correctness check only)
# ----------------------------------------------------------------------------
def ref_conv_bn_relu(x, w, b, gamma, beta, stride):
    pad = w.shape[2] // 2
    y = jax.lax.conv_general_dilated(
        x, w, (stride, stride), [(pad, pad), (pad, pad)],
        dimension_numbers=("NCHW", "OIHW", "NCHW"))
    y = y + b[None, :, None, None]
    mean = jnp.mean(y, axis=(0, 2, 3), keepdims=True)
    var = jnp.mean((y - mean) ** 2, axis=(0, 2, 3), keepdims=True)
    y = (y - mean) * jax.lax.rsqrt(var + BN_EPS) * gamma[None, :, None, None] \
        + beta[None, :, None, None]
    return jnp.maximum(y, 0.0)


def ref_attention_relu(x, wqkv, bqkv, wproj, bproj):
    C = wproj.shape[0]
    B, Cin, H, W = x.shape
    qkv = jnp.einsum("bchw,oc->bohw", x, wqkv[:, :, 0, 0]) + bqkv[None, :, None, None]
    q, k, v = qkv[:, :C], qkv[:, C:2 * C], qkv[:, 2 * C:]
    q = q.reshape(B, C, H * W).transpose(0, 2, 1)
    k = k.reshape(B, C, H * W)
    v = v.reshape(B, C, H * W).transpose(0, 2, 1)
    attn = jax.nn.softmax(jnp.einsum("bpc,bck->bpk", q, k) / (k.shape[-1] ** 0.5), -1)
    o = jnp.einsum("bpk,bkc->bpc", attn, v).transpose(0, 2, 1).reshape(B, C, H, W)
    o = jnp.einsum("bchw,oc->bohw", o, wproj[:, :, 0, 0]) + bproj[None, :, None, None]
    return jnp.maximum(o, 0.0)


def ref_coatnet_forward(x, params):
    x = ref_conv_bn_relu(x, *params["s1b1"], stride=1)
    x = ref_conv_bn_relu(x, *params["s1b2"], stride=2)
    x = ref_conv_bn_relu(x, *params["s2b1"], stride=2)
    x = ref_attention_relu(x, *params["s2b2"])
    x = ref_attention_relu(x, *params["s3b1"])
    x = ref_attention_relu(x, *params["s3b2"])
    pooled = jnp.mean(x, axis=(2, 3))
    return pooled @ params["fc"][0].T + params["fc"][1]


def _conv_params(key, cin, cout, k):
    k1, k2, k3, k4 = jax.random.split(key, 4)
    return (0.1 * jax.random.normal(k1, (cout, cin, k, k), jnp.float32),
            0.1 * jax.random.normal(k2, (cout,), jnp.float32),
            1.0 + 0.1 * jax.random.normal(k3, (cout,), jnp.float32),
            0.1 * jax.random.normal(k4, (cout,), jnp.float32))


def _attn_params(key, cin, cout):
    k1, k2, k3, k4 = jax.random.split(key, 4)
    return (0.1 * jax.random.normal(k1, (3 * cout, cin, 1, 1), jnp.float32),
            0.1 * jax.random.normal(k2, (3 * cout,), jnp.float32),
            0.1 * jax.random.normal(k3, (cout, cout, 1, 1), jnp.float32),
            0.1 * jax.random.normal(k4, (cout,), jnp.float32))


if __name__ == "__main__":
    key = jax.random.PRNGKey(0)
    ks = jax.random.split(key, 16)

    # ---- standalone conv block (15x15, row_tile=256 -> exercises the multi-tile
    #      per-tile partial BN statistics + zero row padding) -----------------------
    x_c = jax.random.normal(ks[0], (2, 4, 15, 15), jnp.float32)
    pc = _conv_params(ks[1], 4, 8, 3)
    y_conv = jax.block_until_ready(conv_bn_relu(x_c, *pc, stride=1, row_tile=256))
    y_conv_ref = ref_conv_bn_relu(x_c, *pc, stride=1)
    assert y_conv.shape == y_conv_ref.shape
    assert jnp.allclose(y_conv, y_conv_ref, atol=3e-2, rtol=3e-2), "conv block mismatch"

    # ---- standalone attention block (P=256, q_tile=128 -> two query tiles over the
    #      resident K/V scratch, fused qkv + proj) ----------------------------------
    x_a = jax.random.normal(ks[2], (2, 8, 16, 16), jnp.float32)
    pa = _attn_params(ks[3], 8, 8)
    y_attn = jax.block_until_ready(attention_relu(x_a, *pa, q_tile=128))
    y_attn_ref = ref_attention_relu(x_a, *pa)
    assert y_attn.shape == y_attn_ref.shape
    assert jnp.allclose(y_attn, y_attn_ref, atol=3e-2, rtol=3e-2), "attn block mismatch"

    # ---- full CoAtNet: input_shape=(16,16,4), channels=[8,16,32,64], 10 classes ----
    channels = [8, 16, 32, 64]
    params = {
        "s1b1": _conv_params(ks[4], 4, channels[0], 3),
        "s1b2": _conv_params(ks[5], channels[0], channels[1], 3),
        "s2b1": _conv_params(ks[6], channels[1], channels[2], 3),
        "s2b2": _attn_params(ks[7], channels[2], channels[2]),
        "s3b1": _attn_params(ks[8], channels[2], channels[3]),
        "s3b2": _attn_params(ks[9], channels[3], channels[3]),
        "fc": (0.1 * jax.random.normal(ks[10], (10, channels[3]), jnp.float32),
               0.1 * jax.random.normal(ks[11], (10,), jnp.float32)),
    }
    x = jax.random.normal(ks[12], (2, 4, 16, 16), jnp.float32)
    logits = jax.block_until_ready(coatnet_forward(x, params))
    logits_ref = ref_coatnet_forward(x, params)
    assert logits.shape == (2, 10)
    # bf16 MXU operands + bf16 intermediates -> loosened end-to-end tolerance.
    assert jnp.allclose(logits, logits_ref, atol=1e-1, rtol=1e-1), "full model mismatch"

    print("KERNEL_OK")
</pallas_src>

<mosaic_0001>
module attributes {stable_mosaic.version = 11 : i64} {
  func.func @_conv_gemm_stats_kernel(%arg0: i32, %arg1: memref<256x36xbf16, #tpu.memory_space<vmem>>, %arg2: memref<36x128xbf16, #tpu.memory_space<vmem>>, %arg3: memref<256x128xbf16, #tpu.memory_space<vmem>>, %arg4: memref<1x2x128xf32, #tpu.memory_space<vmem>>) attributes {dimension_semantics = [#tpu.dimension_semantics<parallel>], iteration_bounds = array<i64: 2>, scalar_prefetch = 0 : i64, scratch_operands = 0 : i64, tpu.core_type = #tpu.core_type<tc>, window_params = [{transform_indices = @transform_0, window_bounds = array<i64: 256, 36>}, {pipeline_mode = #tpu.pipeline_mode<synchronous>, transform_indices = @transform_1, window_bounds = array<i64: 36, 128>}, {transform_indices = @transform_2, window_bounds = array<i64: 256, 128>}, {transform_indices = @transform_3, window_bounds = array<i64: 1, 2, 128>}]} {
    %c0 = arith.constant 0 : index
    %c0_0 = arith.constant 0 : index
    %0 = vector.load %arg1[%c0, %c0_0] : memref<256x36xbf16, #tpu.memory_space<vmem>>, vector<256x36xbf16>
    %c0_1 = arith.constant 0 : index
    %c0_2 = arith.constant 0 : index
    %1 = vector.load %arg2[%c0_1, %c0_2] : memref<36x128xbf16, #tpu.memory_space<vmem>>, vector<36x128xbf16>
    %cst = arith.constant dense<0.000000e+00> : vector<256x128xf32>
    %2 = tpu.matmul %0, %1, %cst {dimension_numbers = #tpu.dot_dimension_numbers<[1], [0], [0], [1], [0, 0, 1, 1], [], []>} : vector<256x36xbf16>, vector<36x128xbf16>, vector<256x128xf32> -> vector<256x128xf32>
    %3 = arith.truncf %2 : vector<256x128xf32> to vector<256x128xbf16>
    %c0_3 = arith.constant 0 : index
    %c0_4 = arith.constant 0 : index
    %4 = vector.load %arg3[%c0_3, %c0_4] : memref<256x128xbf16, #tpu.memory_space<vmem>>, vector<256x128xbf16>
    tpu.vector_store %arg3[%c0_3, %c0_4], %3 {strides = array<i32>} : memref<256x128xbf16, #tpu.memory_space<vmem>>, vector<256x128xbf16>,
    %cst_5 = arith.constant dense<0.000000e+00> : vector<128xf32>
    %5 = vector.multi_reduction <add>, %2, %cst_5 [0] : vector<256x128xf32> to vector<128xf32>
    %6 = vector.shape_cast %5 : vector<128xf32> to vector<1x128xf32>
    %7 = arith.mulf %2, %2 : vector<256x128xf32>
    %cst_6 = arith.constant dense<0.000000e+00> : vector<128xf32>
    %8 = vector.multi_reduction <add>, %7, %cst_6 [0] : vector<256x128xf32> to vector<128xf32>
    %9 = vector.shape_cast %8 : vector<128xf32> to vector<1x128xf32>
    %10 = tpu.concatenate %6, %9 in 0 : vector<1x128xf32>, vector<1x128xf32> -> vector<2x128xf32>
    %c0_7 = arith.constant 0 : index
    %c0_8 = arith.constant 0 : index
    %c0_9 = arith.constant 0 : index
    %11 = vector.load %arg4[%c0_7, %c0_8, %c0_9] : memref<1x2x128xf32, #tpu.memory_space<vmem>>, vector<1x2x128xf32>
    %12 = vector.shape_cast %11 : vector<1x2x128xf32> to vector<2x128xf32>
    %13 = vector.shape_cast %10 : vector<2x128xf32> to vector<1x2x128xf32>
    tpu.vector_store %arg4[%c0_7, %c0_8, %c0_9], %13 {strides = array<i32>} : memref<1x2x128xf32, #tpu.memory_space<vmem>>, vector<1x2x128xf32>,
    return
  }
  func.func @transform_0(%arg0: i32) -> (i32, i32) {
    %c0_i32 = arith.constant 0 : i32
    %c0_i32_0 = arith.constant 0 : i32
    return %arg0, %c0_i32 : i32, i32
  }
  func.func @transform_1(%arg0: i32) -> (i32, i32) {
    %c0_i32 = arith.constant 0 : i32
    %c0_i32_0 = arith.constant 0 : i32
    %c0_i32_1 = arith.constant 0 : i32
    return %c0_i32, %c0_i32_0 : i32, i32
  }
  func.func @transform_2(%arg0: i32) -> (i32, i32) {
    %c0_i32 = arith.constant 0 : i32
    %c0_i32_0 = arith.constant 0 : i32
    return %arg0, %c0_i32 : i32, i32
  }
  func.func @transform_3(%arg0: i32) -> (i32, i32, i32) {
    %c0_i32 = arith.constant 0 : i32
    %c0_i32_0 = arith.constant 0 : i32
    %c0_i32_1 = arith.constant 0 : i32
    return %arg0, %c0_i32, %c0_i32_0 : i32, i32, i32
  }
}

</mosaic_0001>

<llo_original>
// kernel: tpu_custom_call.1
$region0: #{tpu_custom_call.1}
  #allocation0 [shape = 'u32[]', space=smem, size = 0x4, offset = 0x4, fixed_abs, tag = 'smem constant byte address 0x4 - core index']
  #allocation1 [shape = 'u32[144,128]{1,0:T(1,128)}', space=vmem, size = 0x12000, scoped, tag = 'internal scratch']
  %s0 = inlined_call_operand.vmem [shape: bf16[512,36], index: 0, kind: input, shape index: {}]
  %s1 = inlined_call_operand.vmem [shape: bf16[36,128], index: 1, kind: input, shape index: {}]
  %s2 = inlined_call_operand.hbm [shape: bf16[512,128], index: 2, kind: output, shape index: {0}]
  %s3 = inlined_call_operand.hbm [shape: f32[2,2,128], index: 3, kind: output, shape index: {1}]
  %4 = xla_tuple %s2, %s3
  %s5 = sld [smem:[#allocation0]]
  $region49: #{tpu_custom_call.1} parent=0
    _
  %s7 = ssub.s32 1, %s5
  %s8 = scalar_select 0, %s7, %s5
  $region1: #{tpu_custom_call.1} parent=0
    #allocation2 [shape = 'u8[131072]{0}', space=vmem, size = 0x20000, scoped, tag = 'output window, operand 0']
    #allocation3 [shape = 's32[2]{0}', space=sflag, size = 0x8, scoped, tag = 'scoped memory for tpu_custom_call.1']
    #allocation4 [shape = 'u8[2048]{0}', space=vmem, size = 0x800, scoped, tag = 'output window, operand 1']
    #allocation5 [shape = 's32[2]{0}', space=sflag, size = 0x8, scoped, tag = 'scoped memory for tpu_custom_call.1']
    %9 = vsyncpa [#allocation3], 0
    %s10 = scalar_lea.sflag [#allocation3], 1
    %11 = vsyncpa %s10, 0
    %12 = vsyncpa [#allocation5], 0
    %s13 = scalar_lea.sflag [#allocation5], 1
    %14 = vsyncpa %s13, 0
    loop: start=0, step=1, limit=4
    $region2: #{tpu_custom_call.1} parent=1 // loop_pre_header
      _
    $region3: #{tpu_custom_call.1} parent=1 // loop_header
      %s16 = sphi 0, %s20
      %p17 = scmp.ge.s32.totalorder %s16, 4
      %s26 = sphi 0, %s28
      %s29 = sphi 0, %s26
      %s30 = sphi 0, %s29
      %s46 = sphi 0, %s30
      %s50 = sphi 0, %s50
      %s52 = sphi 0, %s50
      %s53 = sphi 0, %s52
      %s67 = sphi 0, %s53
      %s73 = sphi 0, %s75
      %s76 = sphi 0, %s73
      %s77 = sphi 0, %s76
      %s93 = sphi 0, %s77
      %s99 = sphi 0, %s101
      %s102 = sphi 0, %s99
      %s103 = sphi 0, %s102
      %s119 = sphi 0, %s103
    $region4: #{tpu_custom_call.1} parent=1 // loop_header_branch
      %19 = sbr.rel (%p17) target = $region8
    $region5: #{tpu_custom_call.1} parent=1 // loop_body
      %s21 = ssub.s32 %s16, 1
      %s22 = ssub.s32 %s16, 2
      %s23 = sadd.s32 %s16, 1
      %s24 = ssub.s32 %s16, %s23
      %p25 = scmp.eq.s32.totalorder %s24, 0
      %s27 = sadd.s32 %s26, 1
      %s28 = scalar_select %p25, %s26, %s27
      %p31 = pneg %p25
      %p32 = scmp.eq.s32.totalorder %s16, 1
      %p33 = por %p31, %p32
      %p34 = scmp.ne.s32.totalorder %s26, %s29
      %p35 = scmp.eq.s32.totalorder %s16, 0
      %p36 = por %p34, %p35
      %p37 = scmp.ne.s32.totalorder %s26, %s29
      %p38 = scmp.eq.s32.totalorder %s21, 1
      %p39 = por %p37, %p38
      %p40 = scmp.ne.s32.totalorder %s29, %s30
      %p41 = scmp.eq.s32.totalorder %s21, 0
      %p42 = por %p40, %p41
      %p43 = scmp.ne.s32.totalorder %s29, %s30
      %p44 = scmp.eq.s32.totalorder %s22, 1
      %p45 = por %p43, %p44
      %p47 = scmp.ne.s32.totalorder %s30, %s46
      %p48 = scmp.eq.s32.totalorder %s22, 0
      %p49 = por %p47, %p48
      %s51 = sadd.s32 %s50, 1
      %p54 = scmp.eq.s32.totalorder %s16, 1
      %p55 = scmp.ne.s32.totalorder %s50, %s52
      %p56 = scmp.eq.s32.totalorder %s16, 0
      %p57 = por %p55, %p56
      %p58 = scmp.ne.s32.totalorder %s50, %s52
      %p59 = scmp.eq.s32.totalorder %s21, 1
      %p60 = por %p58, %p59
      %p61 = scmp.ne.s32.totalorder %s52, %s53
      %p62 = scmp.eq.s32.totalorder %s21, 0
      %p63 = por %p61, %p62
      %p64 = scmp.ne.s32.totalorder %s52, %s53
      %p65 = scmp.eq.s32.totalorder %s22, 1
      %p66 = por %p64, %p65
      %p68 = scmp.ne.s32.totalorder %s53, %s67
      %p69 = scmp.eq.s32.totalorder %s22, 0
      %p70 = por %p68, %p69
      %s71 = ssub.s32 %s16, %s23
      %p72 = scmp.eq.s32.totalorder %s71, 0
      %s74 = sadd.s32 %s73, 1
      %s75 = scalar_select %p72, %s73, %s74
      %p78 = pneg %p72
      %p79 = scmp.eq.s32.totalorder %s16, 1
      %p80 = por %p78, %p79
      %p81 = scmp.ne.s32.totalorder %s73, %s76
      %p82 = scmp.eq.s32.totalorder %s16, 0
      %p83 = por %p81, %p82
      %p84 = scmp.ne.s32.totalorder %s73, %s76
      %p85 = scmp.eq.s32.totalorder %s21, 1
      %p86 = por %p84, %p85
      %p87 = scmp.ne.s32.totalorder %s76, %s77
      %p88 = scmp.eq.s32.totalorder %s21, 0
      %p89 = por %p87, %p88
      %p90 = scmp.ne.s32.totalorder %s76, %s77
      %p91 = scmp.eq.s32.totalorder %s22, 1
      %p92 = por %p90, %p91
      %p94 = scmp.ne.s32.totalorder %s77, %s93
      %p95 = scmp.eq.s32.totalorder %s22, 0
      %p96 = por %p94, %p95
      %s97 = ssub.s32 %s16, %s23
      %p98 = scmp.eq.s32.totalorder %s97, 0
      %s100 = sadd.s32 %s99, 1
      %s101 = scalar_select %p98, %s99, %s100
      %p104 = pneg %p98
      %p105 = scmp.eq.s32.totalorder %s16, 1
      %p106 = por %p104, %p105
      %p107 = scmp.ne.s32.totalorder %s99, %s102
      %p108 = scmp.eq.s32.totalorder %s16, 0
      %p109 = por %p107, %p108
      %p110 = scmp.ne.s32.totalorder %s99, %s102
      %p111 = scmp.eq.s32.totalorder %s21, 1
      %p112 = por %p110, %p111
      %p113 = scmp.ne.s32.totalorder %s102, %s103
      %p114 = scmp.eq.s32.totalorder %s21, 0
      %p115 = por %p113, %p114
      %p116 = scmp.ne.s32.totalorder %s102, %s103
      %p117 = scmp.eq.s32.totalorder %s22, 1
      %p118 = por %p116, %p117
      %p120 = scmp.ne.s32.totalorder %s103, %s119
      %p121 = scmp.eq.s32.totalorder %s22, 0
      %p122 = por %p120, %p121
      %p123 = scmp.le.s32.totalorder 1, %s16
      %p124 = scmp.lt.s32.totalorder %s16, 3
      %p125 = pnand %p123, %p124
      %p126 = pneg %p125
      // Predicated region
      $region9: #{tpu_custom_call.1} parent=5 // pred_check
        _
      $region10: #{tpu_custom_call.1} parent=5 // pred_check_branch
        %128 = sbr.rel (%p125) target = $region12
      $region11: #{tpu_custom_call.1} parent=5 // pred_region
        %s129 = ssub.s32 %s16, 1
        // Predicated region
        $region13: #{tpu_custom_call.1} parent=11 // pred_check
          %p130 = pneg %p63
        $region14: #{tpu_custom_call.1} parent=11 // pred_check_branch
          %132 = sbr.rel (%p130) target = $region16
        $region15: #{tpu_custom_call.1} parent=11 // pred_region
          _
        $region16: #{tpu_custom_call.1} parent=11 // pred_fallthru
          _
      $region12: #{tpu_custom_call.1} parent=5 // pred_fallthru
        _
      %p133 = scmp.lt.s32.totalorder %s16, 2
      // Predicated region
      $region17: #{tpu_custom_call.1} parent=5 // pred_check
        %p134 = pneg %p133
      $region18: #{tpu_custom_call.1} parent=5 // pred_check_branch
        %136 = sbr.rel (%p134) target = $region20
      $region19: #{tpu_custom_call.1} parent=5 // pred_region
        // Predicated region
        $region21: #{tpu_custom_call.1} parent=19 // pred_check
          %p137 = pneg %p36
        $region22: #{tpu_custom_call.1} parent=19 // pred_check_branch
          %139 = sbr.rel (%p137) target = $region24
        $region23: #{tpu_custom_call.1} parent=19 // pred_region
          %s140 = smul.u32 32, %s16
          %p141 = scmp.lt.s32.totalorder %s140, 63
          %s142 = scalar_select %p141, %s140, 63
          %s143 = smul.addr %s142, 4
          %s144 = scalar_lea.vmem %s0, %s143
          %s145 = smul.u32 32, %s16
        $region24: #{tpu_custom_call.1} parent=19 // pred_fallthru
          _
      $region20: #{tpu_custom_call.1} parent=5 // pred_fallthru
        _
      %p146 = scmp.le.s32.totalorder 1, %s16
      %p147 = scmp.lt.s32.totalorder %s16, 3
      %p148 = pnand %p146, %p147
      %p149 = pneg %p148
      // Predicated region
      $region25: #{tpu_custom_call.1} parent=5 // pred_check
        _
      $region26: #{tpu_custom_call.1} parent=5 // pred_check_branch
        %151 = sbr.rel (%p148) target = $region28
      $region27: #{tpu_custom_call.1} parent=5 // pred_region
        %s152 = ssub.s32 %s16, 1
        %s153 = smul.u32 32, %s21
        %p154 = scmp.lt.s32.totalorder %s153, 63
        %s155 = scalar_select %p154, %s153, 63
        %s156 = smul.addr %s155, 4
        %s157 = scalar_lea.vmem %s0, %s156
        %p158 = pneg %p42
        %p159 = pneg %p39
        %p160 = pneg %p63
        %p161 = pneg %p60
        %p162 = pneg %p89
        %p163 = pneg %p86
        %s164 = sand.u32 %s76, 1
        %s165 = scalar_lea.sflag [#allocation3], %s164
        %s166 = sand.u32 %s76, 1
        %s167 = smul.addr %s166, 128
        %s168 = scalar_lea.vmem [#allocation2], %s167
        %p169 = pneg %p115
        %p170 = pneg %p112
        %s171 = sand.u32 %s102, 1
        %s172 = scalar_lea.sflag [#allocation5], %s171
        %s173 = sand.u32 %s102, 1
        %s174 = smul.addr %s173, 2
        %s175 = scalar_lea.vmem [#allocation4], %s174
        %s176 = smul.u32 32, %s21
        %p177 = scmp.lt.s32.totalorder %s176, 63
        %s178 = scalar_select %p177, %s176, 63
        %s179 = smul.addr %s178, 4
        %s180 = scalar_lea.vmem %s0, %s179
        %s181 = smul.u32 32, %s21
        %s182 = smul.u32 32, %s21
        %v184 = vld [vmem:[%s180] sm:$0xf]
        %v185 = vld [vmem:[%s180 + $0x4] sm:$0xf]
        %v186 = vld [vmem:[%s180 + $0x8] sm:$0xf]
        %v187 = vld [vmem:[%s180 + $0xc] sm:$0xf]
        %v188 = vld [vmem:[%s180 + $0x10] sm:$0xf]
        %v189 = vld [vmem:[%s180 + $0x14] sm:$0xf]
        %v190 = vld [vmem:[%s180 + $0x18] sm:$0xf]
        %v191 = vld [vmem:[%s180 + $0x1c] sm:$0xf]
        %v192 = vld [vmem:[%s180 + $0x20] sm:$0xf]
        %v193 = vld [vmem:[%s180 + $0x24] sm:$0xf]
        %v194 = vld [vmem:[%s180 + $0x28] sm:$0xf]
        %v195 = vld [vmem:[%s180 + $0x2c] sm:$0xf]
        %v196 = vld [vmem:[%s180 + $0x30] sm:$0xf]
        %v197 = vld [vmem:[%s180 + $0x34] sm:$0xf]
        %v198 = vld [vmem:[%s180 + $0x38] sm:$0xf]
        %v199 = vld [vmem:[%s180 + $0x3c] sm:$0xf]
        %v200 = vld [vmem:[%s180 + $0x40] sm:$0xf]
        %v201 = vld [vmem:[%s180 + $0x44] sm:$0xf]
        %v202 = vld [vmem:[%s180 + $0x48] sm:$0xf]
        %v203 = vld [vmem:[%s180 + $0x4c] sm:$0xf]
        %v204 = vld [vmem:[%s180 + $0x50] sm:$0xf]
        %v205 = vld [vmem:[%s180 + $0x54] sm:$0xf]
        %v206 = vld [vmem:[%s180 + $0x58] sm:$0xf]
        %v207 = vld [vmem:[%s180 + $0x5c] sm:$0xf]
        %v208 = vld [vmem:[%s180 + $0x60] sm:$0xf]
        %v209 = vld [vmem:[%s180 + $0x64] sm:$0xf]
        %v210 = vld [vmem:[%s180 + $0x68] sm:$0xf]
        %v211 = vld [vmem:[%s180 + $0x6c] sm:$0xf]
        %v212 = vld [vmem:[%s180 + $0x70] sm:$0xf]
        %v213 = vld [vmem:[%s180 + $0x74] sm:$0xf]
        %v214 = vld [vmem:[%s180 + $0x78] sm:$0xf]
        %v215 = vld [vmem:[%s180 + $0x7c] sm:$0xf]
        %v216 = vld [vmem:[%s1] sm:$0xf]
        %v217 = vld [vmem:[%s1 + $0x4] sm:$0xf]
        %v218 = vld [vmem:[%s1 + $0x8] sm:$0xf]
        %v219 = vld [vmem:[%s1 + $0xc] sm:$0xf]
        %v220 = vld [vmem:[%s1 + $0x10] sm:$0x3]
        %v253 = vunpack.c.l.b16 %v184
        %v254 = vunpack.c.l.b16 %v185
        %v255 = vunpack.c.l.b16 %v186
        %v256 = vunpack.c.l.b16 %v187
        %v257 = vunpack.c.l.b16 %v188
        %v258 = vunpack.c.l.b16 %v189
        %v259 = vunpack.c.l.b16 %v190
        %v260 = vunpack.c.l.b16 %v191
        %v261 = vunpack.c.l.b16 %v192
        %v262 = vunpack.c.l.b16 %v193
        %v263 = vunpack.c.l.b16 %v194
        %v264 = vunpack.c.l.b16 %v195
        %v265 = vunpack.c.l.b16 %v196
        %v266 = vunpack.c.l.b16 %v197
        %v267 = vunpack.c.l.b16 %v198
        %v268 = vunpack.c.l.b16 %v199
        %v269 = vunpack.c.l.b16 %v200
        %v270 = vunpack.c.l.b16 %v201
        %v271 = vunpack.c.l.b16 %v202
        %v272 = vunpack.c.l.b16 %v203
        %v273 = vunpack.c.l.b16 %v204
        %v274 = vunpack.c.l.b16 %v205
        %v275 = vunpack.c.l.b16 %v206
        %v276 = vunpack.c.l.b16 %v207
        %v277 = vunpack.c.l.b16 %v208
        %v278 = vunpack.c.l.b16 %v209
        %v279 = vunpack.c.l.b16 %v210
        %v280 = vunpack.c.l.b16 %v211
        %v281 = vunpack.c.l.b16 %v212
        %v282 = vunpack.c.l.b16 %v213
        %v283 = vunpack.c.l.b16 %v214
        %v284 = vunpack.c.l.b16 %v215
        %v285 = vpack.c.b16 %v254, %v253
        %v286 = vpack.c.b16 %v256, %v255
        %v287 = vpack.c.b16 %v258, %v257
        %v288 = vpack.c.b16 %v260, %v259
        %v289 = vpack.c.b16 %v262, %v261
        %v290 = vpack.c.b16 %v264, %v263
        %v291 = vpack.c.b16 %v266, %v265
        %v292 = vpack.c.b16 %v268, %v267
        %v293 = vpack.c.b16 %v270, %v269
        %v294 = vpack.c.b16 %v272, %v271
        %v295 = vpack.c.b16 %v274, %v273
        %v296 = vpack.c.b16 %v276, %v275
        %v297 = vpack.c.b16 %v278, %v277
        %v298 = vpack.c.b16 %v280, %v279
        %v299 = vpack.c.b16 %v282, %v281
        %v300 = vpack.c.b16 %v284, %v283
        %v306 = vunpack.c.l.b16 %v216
        %v307 = vunpack.c.l.b16 %v217
        %v308 = vunpack.c.l.b16 %v218
        %v309 = vunpack.c.l.b16 %v219
        %v310 = vunpack.c.l.b16 %v220
        %v311 = vpack.c.b16 %v307, %v306
        %v312 = vpack.c.b16 %v309, %v308
        %v313 = vpack.c.b16 %v310, %v310
        %vm316 = vcmask 293888
        %v318 = vsel %vm316, %v285, 0
        %v321 = vsel %vm316, %v286, 0
        %v324 = vsel %vm316, %v287, 0
        %v327 = vsel %vm316, %v288, 0
        %v330 = vsel %vm316, %v289, 0
        %v333 = vsel %vm316, %v290, 0
        %v336 = vsel %vm316, %v291, 0
        %v339 = vsel %vm316, %v292, 0
        %v342 = vsel %vm316, %v293, 0
        %v345 = vsel %vm316, %v294, 0
        %v348 = vsel %vm316, %v295, 0
        %v351 = vsel %vm316, %v296, 0
        %v354 = vsel %vm316, %v297, 0
        %v357 = vsel %vm316, %v298, 0
        %v360 = vsel %vm316, %v299, 0
        %v363 = vsel %vm316, %v300, 0
        %vm365 = vcmask 1041408
        %v367 = vsel %vm365, %v313, 0
        %369 = vmatprep.subr.bf16.mxu0 0
        %370 = vmatpush1.bf16.msra.mxu0 0
        %371 = vmatprep.subr.bf16.mxu0 0
        %372 = vmatpush1.bf16.msra.mxu0 0
        %373 = vmatprep.subr.bf16.mxu0 0
        %374 = vmatpush1.bf16.msra.mxu0 0
        %375 = vmatprep.subr.bf16.mxu0 0
        %376 = vmatpush1.bf16.msra.mxu0 0
        %377 = vmatprep.subr.bf16.mxu0 0
        %378 = vmatpush1.bf16.msra.mxu0 0
        %379 = vmatprep.subr.bf16.mxu0 0
        %380 = vmatpush1.bf16.msra.mxu0 %v367
        %381 = vmatprep.subr.bf16.mxu0 0
        %382 = vmatpush1.bf16.msra.mxu0 %v312
        %383 = vmatprep.subr.bf16.mxu0 0
        %384 = vmatpush1.bf16.msra.mxu0 %v311
        %385 = vmatprep.subr.bf16.mxu0 0
        %386 = vmatpush2.bf16.msra.mxu0 0
        %387 = vmatprep.subr.bf16.mxu0 0
        %388 = vmatpush2.bf16.msra.mxu0 0
        %389 = vmatprep.subr.bf16.mxu0 0
        %390 = vmatpush2.bf16.msra.mxu0 0
        %391 = vmatprep.subr.bf16.mxu0 0
        %392 = vmatpush2.bf16.msra.mxu0 0
        %393 = vmatprep.subr.bf16.mxu0 0
        %394 = vmatpush2.bf16.msra.mxu0 0
        %395 = vmatprep.subr.bf16.mxu0 0
        %396 = vmatpush2.bf16.msra.mxu0 0
        %397 = vmatprep.subr.bf16.mxu0 0
        %398 = vmatpush2.bf16.msra.mxu0 0
        %399 = vmatprep.subr.bf16.mxu0 0
        %400 = vmatpush2.bf16.msra.mxu0 0
        %401 = vmatprep.mubr.bf16.mxu0 0
        %402 = vmatmul.mubr.bf16.gmra.mxu0 %v318
        %v403 = vpop.f32.mrf.mxu0
        %v404 = vadd.f32 0.0, %v403
        %v405 = vpop.f32.mrf.mxu0
        %v406 = vpop.f32.mrf.mxu0
        %v407 = vadd.f32 0.0, %v406
        %v408 = vpop.f32.mrf.mxu0
        %409 = vmatprep.mubr.bf16.mxu0 0
        %410 = vmatmul.mubr.bf16.gmra.mxu0 %v321
        %v411 = vpop.f32.mrf.mxu0
        %v412 = vadd.f32 0.0, %v411
        %v413 = vpop.f32.mrf.mxu0
        %v414 = vpop.f32.mrf.mxu0
        %v415 = vadd.f32 0.0, %v414
        %v416 = vpop.f32.mrf.mxu0
        %417 = vmatprep.mubr.bf16.mxu0 0
        %418 = vmatmul.mubr.bf16.gmra.mxu0 %v324
        %v419 = vpop.f32.mrf.mxu0
        %v420 = vadd.f32 0.0, %v419
        %v421 = vpop.f32.mrf.mxu0
        %v422 = vpop.f32.mrf.mxu0
        %v423 = vadd.f32 0.0, %v422
        %v424 = vpop.f32.mrf.mxu0
        %425 = vmatprep.mubr.bf16.mxu0 0
        %426 = vmatmul.mubr.bf16.gmra.mxu0 %v327
        %v427 = vpop.f32.mrf.mxu0
        %v428 = vadd.f32 0.0, %v427
        %v429 = vpop.f32.mrf.mxu0
        %v430 = vpop.f32.mrf.mxu0
        %v431 = vadd.f32 0.0, %v430
        %v432 = vpop.f32.mrf.mxu0
        %433 = vmatprep.mubr.bf16.mxu0 0
        %434 = vmatmul.mubr.bf16.gmra.mxu0 %v330
        %v435 = vpop.f32.mrf.mxu0
        %v436 = vadd.f32 0.0, %v435
        %v437 = vpop.f32.mrf.mxu0
        %v438 = vpop.f32.mrf.mxu0
        %v439 = vadd.f32 0.0, %v438
        %v440 = vpop.f32.mrf.mxu0
        %441 = vmatprep.mubr.bf16.mxu0 0
        %442 = vmatmul.mubr.bf16.gmra.mxu0 %v333
        %v443 = vpop.f32.mrf.mxu0
        %v444 = vadd.f32 0.0, %v443
        %v445 = vpop.f32.mrf.mxu0
        %v446 = vpop.f32.mrf.mxu0
        %v447 = vadd.f32 0.0, %v446
        %v448 = vpop.f32.mrf.mxu0
        %449 = vmatprep.mubr.bf16.mxu0 0
        %450 = vmatmul.mubr.bf16.gmra.mxu0 %v336
        %v451 = vpop.f32.mrf.mxu0
        %v452 = vadd.f32 0.0, %v451
        %v453 = vpop.f32.mrf.mxu0
        %v454 = vpop.f32.mrf.mxu0
        %v455 = vadd.f32 0.0, %v454
        %v456 = vpop.f32.mrf.mxu0
        %457 = vmatprep.mubr.bf16.mxu0 0
        %458 = vmatmul.mubr.bf16.gmra.mxu0 %v339
        %v459 = vpop.f32.mrf.mxu0
        %v460 = vadd.f32 0.0, %v459
        %v461 = vpop.f32.mrf.mxu0
        %v462 = vpop.f32.mrf.mxu0
        %v463 = vadd.f32 0.0, %v462
        %v464 = vpop.f32.mrf.mxu0
        %465 = vmatprep.mubr.bf16.mxu0 0
        %466 = vmatmul.mubr.bf16.gmra.mxu0 %v342
        %v467 = vpop.f32.mrf.mxu0
        %v468 = vadd.f32 0.0, %v467
        %v469 = vpop.f32.mrf.mxu0
        %v470 = vpop.f32.mrf.mxu0
        %v471 = vadd.f32 0.0, %v470
        %v472 = vpop.f32.mrf.mxu0
        %473 = vmatprep.mubr.bf16.mxu0 0
        %474 = vmatmul.mubr.bf16.gmra.mxu0 %v345
        %v475 = vpop.f32.mrf.mxu0
        %v476 = vadd.f32 0.0, %v475
        %v477 = vpop.f32.mrf.mxu0
        %v478 = vpop.f32.mrf.mxu0
        %v479 = vadd.f32 0.0, %v478
        %v480 = vpop.f32.mrf.mxu0
        %481 = vmatprep.mubr.bf16.mxu0 0
        %482 = vmatmul.mubr.bf16.gmra.mxu0 %v348
        %v483 = vpop.f32.mrf.mxu0
        %v484 = vadd.f32 0.0, %v483
        %v485 = vpop.f32.mrf.mxu0
        %v486 = vpop.f32.mrf.mxu0
        %v487 = vadd.f32 0.0, %v486
        %v488 = vpop.f32.mrf.mxu0
        %489 = vmatprep.mubr.bf16.mxu0 0
        %490 = vmatmul.mubr.bf16.gmra.mxu0 %v351
        %v491 = vpop.f32.mrf.mxu0
        %v492 = vadd.f32 0.0, %v491
        %v493 = vpop.f32.mrf.mxu0
        %v494 = vpop.f32.mrf.mxu0
        %v495 = vadd.f32 0.0, %v494
        %v496 = vpop.f32.mrf.mxu0
        %497 = vmatprep.mubr.bf16.mxu0 0
        %498 = vmatmul.mubr.bf16.gmra.mxu0 %v354
        %v499 = vpop.f32.mrf.mxu0
        %v500 = vadd.f32 0.0, %v499
        %v501 = vpop.f32.mrf.mxu0
        %v502 = vpop.f32.mrf.mxu0
        %v503 = vadd.f32 0.0, %v502
        %v504 = vpop.f32.mrf.mxu0
        %505 = vmatprep.mubr.bf16.mxu0 0
        %506 = vmatmul.mubr.bf16.gmra.mxu0 %v357
        %v507 = vpop.f32.mrf.mxu0
        %v508 = vadd.f32 0.0, %v507
        %v509 = vpop.f32.mrf.mxu0
        %v510 = vpop.f32.mrf.mxu0
        %v511 = vadd.f32 0.0, %v510
        %v512 = vpop.f32.mrf.mxu0
        %513 = vmatprep.mubr.bf16.mxu0 0
        %514 = vmatmul.mubr.bf16.gmra.mxu0 %v360
        %v515 = vpop.f32.mrf.mxu0
        %v516 = vadd.f32 0.0, %v515
        %v517 = vpop.f32.mrf.mxu0
        %v518 = vpop.f32.mrf.mxu0
        %v519 = vadd.f32 0.0, %v518
        %v520 = vpop.f32.mrf.mxu0
        %521 = vmatprep.mubr.bf16.mxu0 0
        %522 = vmatmul.mubr.bf16.gmra.mxu0 %v363
        %v523 = vpop.f32.mrf.mxu0
        %v524 = vadd.f32 0.0, %v523
        %v525 = vpop.f32.mrf.mxu0
        %v526 = vpop.f32.mrf.mxu0
        %v527 = vadd.f32 0.0, %v526
        %v528 = vpop.f32.mrf.mxu0
        %529 = vdwg.mxu0
        %v530 = vpack.c.bf16 %v407, %v404
        %v531 = vpack.c.bf16 %v415, %v412
        %v532 = vpack.c.bf16 %v423, %v420
        %v533 = vpack.c.bf16 %v431, %v428
        %v534 = vpack.c.bf16 %v439, %v436
        %v535 = vpack.c.bf16 %v447, %v444
        %v536 = vpack.c.bf16 %v455, %v452
        %v537 = vpack.c.bf16 %v463, %v460
        %v538 = vpack.c.bf16 %v471, %v468
        %v539 = vpack.c.bf16 %v479, %v476
        %v540 = vpack.c.bf16 %v487, %v484
        %v541 = vpack.c.bf16 %v495, %v492
        %v542 = vpack.c.bf16 %v503, %v500
        %v543 = vpack.c.bf16 %v511, %v508
        %v544 = vpack.c.bf16 %v519, %v516
        %v545 = vpack.c.bf16 %v527, %v524
        %v562 = vunpack.c.l.b16 %v530
        %v563 = vunpack.c.h.b16 %v530
        %v564 = vunpack.c.l.b16 %v531
        %v565 = vunpack.c.h.b16 %v531
        %v566 = vunpack.c.l.b16 %v532
        %v567 = vunpack.c.h.b16 %v532
        %v568 = vunpack.c.l.b16 %v533
        %v569 = vunpack.c.h.b16 %v533
        %v570 = vunpack.c.l.b16 %v534
        %v571 = vunpack.c.h.b16 %v534
        %v572 = vunpack.c.l.b16 %v535
        %v573 = vunpack.c.h.b16 %v535
        %v574 = vunpack.c.l.b16 %v536
        %v575 = vunpack.c.h.b16 %v536
        %v576 = vunpack.c.l.b16 %v537
        %v577 = vunpack.c.h.b16 %v537
        %v578 = vunpack.c.l.b16 %v538
        %v579 = vunpack.c.h.b16 %v538
        %v580 = vunpack.c.l.b16 %v539
        %v581 = vunpack.c.h.b16 %v539
        %v582 = vunpack.c.l.b16 %v540
        %v583 = vunpack.c.h.b16 %v540
        %v584 = vunpack.c.l.b16 %v541
        %v585 = vunpack.c.h.b16 %v541
        %v586 = vunpack.c.l.b16 %v542
        %v587 = vunpack.c.h.b16 %v542
        %v588 = vunpack.c.l.b16 %v543
        %v589 = vunpack.c.h.b16 %v543
        %v590 = vunpack.c.l.b16 %v544
        %v591 = vunpack.c.h.b16 %v544
        %v592 = vunpack.c.l.b16 %v545
        %v593 = vunpack.c.h.b16 %v545
        %v594 = vpack.c.b16 %v562, %v562
        %v595 = vpack.c.b16 %v563, %v563
        %v596 = vpack.c.b16 %v564, %v564
        %v597 = vpack.c.b16 %v565, %v565
        %v598 = vpack.c.b16 %v566, %v566
        %v599 = vpack.c.b16 %v567, %v567
        %v600 = vpack.c.b16 %v568, %v568
        %v601 = vpack.c.b16 %v569, %v569
        %v602 = vpack.c.b16 %v570, %v570
        %v603 = vpack.c.b16 %v571, %v571
        %v604 = vpack.c.b16 %v572, %v572
        %v605 = vpack.c.b16 %v573, %v573
        %v606 = vpack.c.b16 %v574, %v574
        %v607 = vpack.c.b16 %v575, %v575
        %v608 = vpack.c.b16 %v576, %v576
        %v609 = vpack.c.b16 %v577, %v577
        %v610 = vpack.c.b16 %v578, %v578
        %v611 = vpack.c.b16 %v579, %v579
        %v612 = vpack.c.b16 %v580, %v580
        %v613 = vpack.c.b16 %v581, %v581
        %v614 = vpack.c.b16 %v582, %v582
        %v615 = vpack.c.b16 %v583, %v583
        %v616 = vpack.c.b16 %v584, %v584
        %v617 = vpack.c.b16 %v585, %v585
        %v618 = vpack.c.b16 %v586, %v586
        %v619 = vpack.c.b16 %v587, %v587
        %v620 = vpack.c.b16 %v588, %v588
        %v621 = vpack.c.b16 %v589, %v589
        %v622 = vpack.c.b16 %v590, %v590
        %v623 = vpack.c.b16 %v591, %v591
        %v624 = vpack.c.b16 %v592, %v592
        %v625 = vpack.c.b16 %v593, %v593
        %658 = vst [vmem:[%s168] sm:$0xf] %v594
        %659 = vst [vmem:[%s168 + $0x4] sm:$0xf] %v595
        %660 = vst [vmem:[%s168 + $0x8] sm:$0xf] %v596
        %661 = vst [vmem:[%s168 + $0xc] sm:$0xf] %v597
        %662 = vst [vmem:[%s168 + $0x10] sm:$0xf] %v598
        %663 = vst [vmem:[%s168 + $0x14] sm:$0xf] %v599
        %664 = vst [vmem:[%s168 + $0x18] sm:$0xf] %v600
        %665 = vst [vmem:[%s168 + $0x1c] sm:$0xf] %v601
        %666 = vst [vmem:[%s168 + $0x20] sm:$0xf] %v602
        %667 = vst [vmem:[%s168 + $0x24] sm:$0xf] %v603
        %668 = vst [vmem:[%s168 + $0x28] sm:$0xf] %v604
        %669 = vst [vmem:[%s168 + $0x2c] sm:$0xf] %v605
        %670 = vst [vmem:[%s168 + $0x30] sm:$0xf] %v606
        %671 = vst [vmem:[%s168 + $0x34] sm:$0xf] %v607
        %672 = vst [vmem:[%s168 + $0x38] sm:$0xf] %v608
        %673 = vst [vmem:[%s168 + $0x3c] sm:$0xf] %v609
        %674 = vst [vmem:[%s168 + $0x40] sm:$0xf] %v610
        %675 = vst [vmem:[%s168 + $0x44] sm:$0xf] %v611
        %676 = vst [vmem:[%s168 + $0x48] sm:$0xf] %v612
        %677 = vst [vmem:[%s168 + $0x4c] sm:$0xf] %v613
        %678 = vst [vmem:[%s168 + $0x50] sm:$0xf] %v614
        %679 = vst [vmem:[%s168 + $0x54] sm:$0xf] %v615
        %680 = vst [vmem:[%s168 + $0x58] sm:$0xf] %v616
        %681 = vst [vmem:[%s168 + $0x5c] sm:$0xf] %v617
        %682 = vst [vmem:[%s168 + $0x60] sm:$0xf] %v618
        %683 = vst [vmem:[%s168 + $0x64] sm:$0xf] %v619
        %684 = vst [vmem:[%s168 + $0x68] sm:$0xf] %v620
        %685 = vst [vmem:[%s168 + $0x6c] sm:$0xf] %v621
        %686 = vst [vmem:[%s168 + $0x70] sm:$0xf] %v622
        %687 = vst [vmem:[%s168 + $0x74] sm:$0xf] %v623
        %688 = vst [vmem:[%s168 + $0x78] sm:$0xf] %v624
        %689 = vst [vmem:[%s168 + $0x7c] sm:$0xf] %v625
        %v690 = vadd.f32 %v404, %v407
        %v691 = vadd.f32 %v690, %v412
        %v692 = vadd.f32 %v691, %v415
        %v693 = vadd.f32 %v692, %v420
        %v694 = vadd.f32 %v693, %v423
        %v695 = vadd.f32 %v694, %v428
        %v696 = vadd.f32 %v695, %v431
        %v697 = vadd.f32 %v696, %v436
        %v698 = vadd.f32 %v697, %v439
        %v699 = vadd.f32 %v698, %v444
        %v700 = vadd.f32 %v699, %v447
        %v701 = vadd.f32 %v700, %v452
        %v702 = vadd.f32 %v701, %v455
        %v703 = vadd.f32 %v702, %v460
        %v704 = vadd.f32 %v703, %v463
        %v705 = vadd.f32 %v704, %v468
        %v706 = vadd.f32 %v705, %v471
        %v707 = vadd.f32 %v706, %v476
        %v708 = vadd.f32 %v707, %v479
        %v709 = vadd.f32 %v708, %v484
        %v710 = vadd.f32 %v709, %v487
        %v711 = vadd.f32 %v710, %v492
        %v712 = vadd.f32 %v711, %v495
        %v713 = vadd.f32 %v712, %v500
        %v714 = vadd.f32 %v713, %v503
        %v715 = vadd.f32 %v714, %v508
        %v716 = vadd.f32 %v715, %v511
        %v717 = vadd.f32 %v716, %v516
        %v718 = vadd.f32 %v717, %v519
        %v719 = vadd.f32 %v718, %v524
        %v720 = vadd.f32 %v719, %v527
        %v721 = vrot.slane %v720, 4
        %v722 = vadd.f32 %v720, %v721
        %v723 = vrot.slane %v722, 2
        %v724 = vadd.f32 %v722, %v723
        %v725 = vrot.slane %v724, 1
        %v726 = vadd.f32 %v724, %v725
        %v727 = vmul.f32 %v404, %v404
        %v728 = vmul.f32 %v407, %v407
        %v729 = vmul.f32 %v412, %v412
        %v730 = vmul.f32 %v415, %v415
        %v731 = vmul.f32 %v420, %v420
        %v732 = vmul.f32 %v423, %v423
        %v733 = vmul.f32 %v428, %v428
        %v734 = vmul.f32 %v431, %v431
        %v735 = vmul.f32 %v436, %v436
        %v736 = vmul.f32 %v439, %v439
        %v737 = vmul.f32 %v444, %v444
        %v738 = vmul.f32 %v447, %v447
        %v739 = vmul.f32 %v452, %v452
        %v740 = vmul.f32 %v455, %v455
        %v741 = vmul.f32 %v460, %v460
        %v742 = vmul.f32 %v463, %v463
        %v743 = vmul.f32 %v468, %v468
        %v744 = vmul.f32 %v471, %v471
        %v745 = vmul.f32 %v476, %v476
        %v746 = vmul.f32 %v479, %v479
        %v747 = vmul.f32 %v484, %v484
        %v748 = vmul.f32 %v487, %v487
        %v749 = vmul.f32 %v492, %v492
        %v750 = vmul.f32 %v495, %v495
        %v751 = vmul.f32 %v500, %v500
        %v752 = vmul.f32 %v503, %v503
        %v753 = vmul.f32 %v508, %v508
        %v754 = vmul.f32 %v511, %v511
        %v755 = vmul.f32 %v516, %v516
        %v756 = vmul.f32 %v519, %v519
        %v757 = vmul.f32 %v524, %v524
        %v758 = vmul.f32 %v527, %v527
        %v759 = vadd.f32 %v727, %v728
        %v760 = vadd.f32 %v759, %v729
        %v761 = vadd.f32 %v760, %v730
        %v762 = vadd.f32 %v761, %v731
        %v763 = vadd.f32 %v762, %v732
        %v764 = vadd.f32 %v763, %v733
        %v765 = vadd.f32 %v764, %v734
        %v766 = vadd.f32 %v765, %v735
        %v767 = vadd.f32 %v766, %v736
        %v768 = vadd.f32 %v767, %v737
        %v769 = vadd.f32 %v768, %v738
        %v770 = vadd.f32 %v769, %v739
        %v771 = vadd.f32 %v770, %v740
        %v772 = vadd.f32 %v771, %v741
        %v773 = vadd.f32 %v772, %v742
        %v774 = vadd.f32 %v773, %v743
        %v775 = vadd.f32 %v774, %v744
        %v776 = vadd.f32 %v775, %v745
        %v777 = vadd.f32 %v776, %v746
        %v778 = vadd.f32 %v777, %v747
        %v779 = vadd.f32 %v778, %v748
        %v780 = vadd.f32 %v779, %v749
        %v781 = vadd.f32 %v780, %v750
        %v782 = vadd.f32 %v781, %v751
        %v783 = vadd.f32 %v782, %v752
        %v784 = vadd.f32 %v783, %v753
        %v785 = vadd.f32 %v784, %v754
        %v786 = vadd.f32 %v785, %v755
        %v787 = vadd.f32 %v786, %v756
        %v788 = vadd.f32 %v787, %v757
        %v789 = vadd.f32 %v788, %v758
        %v790 = vrot.slane %v789, 4
        %v791 = vadd.f32 %v789, %v790
        %v792 = vrot.slane %v791, 2
        %v793 = vadd.f32 %v791, %v792
        %v794 = vrot.slane %v793, 1
        %v795 = vadd.f32 %v793, %v794
        %vm796 = vcmask 1040384
        %v797 = vsel %vm796, %v726, %v795
        %798 = vst [vmem:[%s175] sm:$0x3] %v797
        %s799 = sand.u32 %s76, 1
        %s800 = scalar_lea.sflag [#allocation3], %s799
        %s801 = sand.u32 %s76, 1
        %s802 = smul.addr %s801, 128
        %s803 = scalar_lea.vmem [#allocation2], %s802
        %s804 = sand.u32 %s102, 1
        %s805 = scalar_lea.sflag [#allocation5], %s804
        %s806 = sand.u32 %s102, 1
        %s807 = smul.addr %s806, 2
        %s808 = scalar_lea.vmem [#allocation4], %s807
        // Predicated region
        $region29: #{tpu_custom_call.1} parent=27 // pred_check
          %p809 = pneg %p86
        $region30: #{tpu_custom_call.1} parent=27 // pred_check_branch
          %811 = sbr.rel (%p809) target = $region32
        $region31: #{tpu_custom_call.1} parent=27 // pred_region
          %s812 = smul.u32 32, %s21
          %s814 = ssub.s32 2048, 2048
          %815 = vsyncadd %s800, %s814
          %s816 = smul.addr %s812, 64
          %s817 = scalar_lea.hbm %s2, %s816
          %s818 = sshll.u32 %s803, 4
          %s819 = int_to_ptr.vmem [resolvable:$true] %s818
          %824 = dma.vmem_to_hbm [thread:$0]  %s819, 2048, %s817, %s800, 64, 64, 4
        $region32: #{tpu_custom_call.1} parent=27 // pred_fallthru
          _
        // Predicated region
        $region33: #{tpu_custom_call.1} parent=27 // pred_check
          %p825 = pneg %p112
        $region34: #{tpu_custom_call.1} parent=27 // pred_check_branch
          %827 = sbr.rel (%p825) target = $region36
        $region35: #{tpu_custom_call.1} parent=27 // pred_region
          %s829 = ssub.s32 32, 32
          %830 = vsyncadd %s805, %s829
          %s831 = smul.addr %s21, 32
          %s832 = scalar_lea.hbm %s3, %s831
          %s834 = sshll.u32 %s808, 4
          %s835 = int_to_ptr.vmem [resolvable:$true] %s834
          %837 = dma.vmem_to_hbm [thread:$0]  %s835, 32, %s832, %s805
        $region36: #{tpu_custom_call.1} parent=27 // pred_fallthru
          _
      $region28: #{tpu_custom_call.1} parent=5 // pred_fallthru
        _
      %p838 = scmp.le.s32.totalorder 2, %s16
      // Predicated region
      $region37: #{tpu_custom_call.1} parent=5 // pred_check
        %p839 = pneg %p838
      $region38: #{tpu_custom_call.1} parent=5 // pred_check_branch
        %841 = sbr.rel (%p839) target = $region40
      $region39: #{tpu_custom_call.1} parent=5 // pred_region
        %s842 = ssub.s32 %s16, 2
        // Predicated region
        $region41: #{tpu_custom_call.1} parent=39 // pred_check
          %p843 = pneg %p92
        $region42: #{tpu_custom_call.1} parent=39 // pred_check_branch
          %845 = sbr.rel (%p843) target = $region44
        $region43: #{tpu_custom_call.1} parent=39 // pred_region
          %s846 = sand.u32 %s77, 1
          %s847 = scalar_lea.sflag [#allocation3], %s846
          %s848 = sand.u32 %s77, 1
          %s849 = smul.addr %s848, 128
          %s850 = scalar_lea.vmem [#allocation2], %s849
          %851 = dma.done %s847, 2048
        $region44: #{tpu_custom_call.1} parent=39 // pred_fallthru
          _
        // Predicated region
        $region45: #{tpu_custom_call.1} parent=39 // pred_check
          %p852 = pneg %p118
        $region46: #{tpu_custom_call.1} parent=39 // pred_check_branch
          %854 = sbr.rel (%p852) target = $region48
        $region47: #{tpu_custom_call.1} parent=39 // pred_region
          %s855 = sand.u32 %s103, 1
          %s856 = scalar_lea.sflag [#allocation5], %s855
          %s857 = sand.u32 %s103, 1
          %s858 = smul.addr %s857, 2
          %s859 = scalar_lea.vmem [#allocation4], %s858
          %860 = dma.done %s856, 32
        $region48: #{tpu_custom_call.1} parent=39 // pred_fallthru
          _
      $region40: #{tpu_custom_call.1} parent=5 // pred_fallthru
        _
    $region6: #{tpu_custom_call.1} parent=1 // loop_footer
      %s20 = sadd.s32 1, %s16
    $region7: #{tpu_custom_call.1} parent=1 // loop_footer_branch
      %15 = sbr.rel target = $region3
    $region8: #{tpu_custom_call.1} parent=1 // loop_exit
      _
    %861 = vsyncpa [#allocation3], 1
    %s862 = scalar_lea.sflag [#allocation3], 1
    %863 = vsyncpa %s862, 1
    %864 = vsyncpa [#allocation5], 1
    %s865 = scalar_lea.sflag [#allocation5], 1
    %866 = vsyncpa %s865, 1

</llo_original>
